<compile_context>
chip_gen: v5e
topology: v5e:2x2
jax: 0.10.0
libtpu: 0.0.40
codegen_flags: <defaults>
</compile_context>

<pallas_src>
import jax
import jax.numpy as jnp
from jax.experimental import pallas as pl
from jax.experimental.pallas import tpu as pltpu


def _round_up(x, m):
    return ((x + m - 1) // m) * m


def _sublane_multiple(dtype):
    # 8 rows for 4-byte dtypes, 16 for 2-byte, 32 for 1-byte (packed sublanes).
    itemsize = jnp.dtype(dtype).itemsize
    return max(8, 8 * (4 // itemsize))


def _gelu_new(x):
    # 0.5 * x * (1 + tanh(sqrt(2/pi) * (x + 0.044715 * x^3)))
    c = 0.7978845608028654  # sqrt(2/pi)
    return 0.5 * x * (1.0 + jnp.tanh(c * (x + 0.044715 * x * x * x)))


def _ffn_kernel(x_ref, wi0_ref, wi1_ref, wo_ref, o_ref, acc_ref):
    # x_ref:   (tm, D)     token tile, native dtype
    # wi0_ref: (D, tf)     wi_0 F-slice
    # wi1_ref: (D, tf)     wi_1 F-slice
    # wo_ref:  (tf, D)     wo F-slice
    # o_ref:   (tm, D)     output tile
    # acc_ref: (tm, D) f32 accumulator scratch (resident across the F axis)
    f = pl.program_id(1)

    @pl.when(f == 0)
    def _():
        acc_ref[...] = jnp.zeros_like(acc_ref)

    x = x_ref[...]
    # Two separate GEMMs (tf >= 128 already fills the MXU N dimension);
    # f32 accumulation on the MXU.
    gate = jnp.dot(x, wi0_ref[...], preferred_element_type=jnp.float32)  # (tm, tf)
    lin = jnp.dot(x, wi1_ref[...], preferred_element_type=jnp.float32)   # (tm, tf)
    hidden = _gelu_new(gate) * lin  # f32 epilogue on VPU/EUP
    # dropout == identity (eval mode)
    # TODO(synk): training-mode dropout (PRNG mask) not implemented.

    # Matches PyTorch's cast of hidden_states to wo.weight.dtype.
    hidden = hidden.astype(wo_ref.dtype)
    acc_ref[...] += jnp.dot(hidden, wo_ref[...], preferred_element_type=jnp.float32)

    @pl.when(f == pl.num_programs(1) - 1)
    def _():
        o_ref[...] = acc_ref[...].astype(o_ref.dtype)


def udop_dense_gated_act_dense(hidden_states, wi0, wi1, wo, *, tm=512, tf=4096):
    """hidden_states: [B, S, d_model]; wi0/wi1: [d_model, d_ff]; wo: [d_ff, d_model].

    Weights are stored pre-transposed relative to nn.Linear.weight so that
    y = x @ W matches y = x @ weight.T in PyTorch.
    """
    B, S, D = hidden_states.shape
    F = wi0.shape[1]
    M = B * S

    a_bytes = jnp.dtype(hidden_states.dtype).itemsize
    w_bytes = jnp.dtype(wi0.dtype).itemsize

    # ---- physical VMEM capacity (conservative fallback fits v7x: 64 MiB/TC) ----
    try:
        vmem_cap = int(pltpu.get_tpu_info().vmem_capacity_bytes)
    except Exception:  # pragma: no cover - robustness only
        vmem_cap = 64 * 1024 * 1024
    vmem_budget = int(vmem_cap * 0.85)

    # ---- effective tile sizes ----
    sub = _sublane_multiple(hidden_states.dtype)
    tm_eff = min(tm, _round_up(M, sub))
    f_full = _round_up(F, 128)
    tf_eff = min(max(_round_up(tf, 128), 128), f_full)

    def _vmem_need(tm_e, tf_e):
        x_t = tm_e * D * a_bytes
        wi_t = D * tf_e * w_bytes          # per wi matrix
        wo_t = tf_e * D * w_bytes
        o_t = tm_e * D * a_bytes
        acc = tm_e * D * 4
        inter = 3 * tm_e * tf_e * 4        # gate / lin / hidden f32 intermediates
        return 2 * (x_t + 2 * wi_t + wo_t + o_t) + acc + inter

    # Shrink the F tile first (keeps tm large for weight-stream amortization),
    # then the M tile, until the double-buffered working set fits.
    while _vmem_need(tm_eff, tf_eff) > vmem_budget and tf_eff > 512:
        tf_eff = _round_up(max(512, tf_eff // 2), 128)
    while _vmem_need(tm_eff, tf_eff) > vmem_budget and tm_eff > 128:
        tm_eff = _round_up(max(128, tm_eff // 2), sub)

    m_pad = _round_up(M, tm_eff)
    n_m = m_pad // tm_eff
    f_pad = _round_up(F, tf_eff)
    n_f = f_pad // tf_eff

    # ---- pad inputs / weights (zero padding contributes exactly 0) ----
    x2d = hidden_states.reshape(M, D)
    if m_pad != M:
        x2d = jnp.pad(x2d, ((0, m_pad - M), (0, 0)))
    wi0_p = jnp.pad(wi0, ((0, 0), (0, f_pad - F))) if f_pad != F else wi0
    wi1_p = jnp.pad(wi1, ((0, 0), (0, f_pad - F))) if f_pad != F else wi1
    wo_p = jnp.pad(wo, ((0, f_pad - F), (0, 0))) if f_pad != F else wo

    # ---- VMEM limit (never above physical capacity; v7x-safe) ----
    need = _vmem_need(tm_eff, tf_eff)
    vmem_limit = int(min(max(int(need * 1.3), 32 * 1024 * 1024), vmem_budget))

    # ---- advisory cost estimate ----
    # Weights are re-streamed once per M tile only if the F axis is tiled
    # (their block index then changes across the grid); with n_f == 1 the
    # weight block index is constant and they are DMA'd exactly once.
    weight_passes = n_m if n_f > 1 else 1
    cost = pl.CostEstimate(
        flops=6 * m_pad * D * f_pad,            # 3 GEMMs: 2*M*D*F each
        transcendentals=m_pad * f_pad,          # tanh in gelu_new
        bytes_accessed=(2 * m_pad * D * a_bytes
                        + weight_passes * 3 * D * f_pad * w_bytes),
    )

    out2d = pl.pallas_call(
        _ffn_kernel,
        out_shape=jax.ShapeDtypeStruct((m_pad, D), hidden_states.dtype),
        grid_spec=pltpu.PrefetchScalarGridSpec(
            num_scalar_prefetch=0,
            grid=(n_m, n_f),
            in_specs=[
                pl.BlockSpec((tm_eff, D), lambda i, f: (i, 0)),   # x tokens
                pl.BlockSpec((D, tf_eff), lambda i, f: (0, f)),   # wi_0 F-slice
                pl.BlockSpec((D, tf_eff), lambda i, f: (0, f)),   # wi_1 F-slice
                pl.BlockSpec((tf_eff, D), lambda i, f: (f, 0)),   # wo F-slice
            ],
            out_specs=pl.BlockSpec((tm_eff, D), lambda i, f: (i, 0)),
            scratch_shapes=[pltpu.VMEM((tm_eff, D), jnp.float32)],
        ),
        compiler_params=pltpu.CompilerParams(
            dimension_semantics=("parallel", "arbitrary"),
            vmem_limit_bytes=vmem_limit,
        ),
        cost_estimate=cost,
    )(x2d, wi0_p, wi1_p, wo_p)

    if m_pad != M:
        out2d = out2d[:M]
    return out2d.reshape(B, S, D)


def _reference(hidden_states, wi0, wi1, wo):
    x = hidden_states.astype(jnp.float32)
    g = _gelu_new(x @ wi0.astype(jnp.float32))
    l = x @ wi1.astype(jnp.float32)
    return ((g * l) @ wo.astype(jnp.float32)).astype(hidden_states.dtype)


if __name__ == "__main__":
    key = jax.random.PRNGKey(0)

    # Test 1: small config consistent with the module (d_model=32, d_ff=64).
    B, S, D, F = 2, 8, 32, 64
    k_x, k_w0, k_w1, k_wo, key = jax.random.split(key, 5)
    hidden_states = jax.random.normal(k_x, (B, S, D), dtype=jnp.float32)
    wi0 = jax.random.normal(k_w0, (D, F), dtype=jnp.float32) * 0.05
    wi1 = jax.random.normal(k_w1, (D, F), dtype=jnp.float32) * 0.05
    wo = jax.random.normal(k_wo, (F, D), dtype=jnp.float32) * 0.05

    out = jax.block_until_ready(udop_dense_gated_act_dense(hidden_states, wi0, wi1, wo))
    ref = _reference(hidden_states, wi0, wi1, wo)
    assert out.shape == (B, S, D)
    assert jnp.allclose(out, ref, atol=1e-4, rtol=1e-4)

    # Test 2: multi-tile M grid (with row padding) and F-axis accumulation (n_f > 1).
    B2, S2, D2, F2 = 2, 100, 256, 512
    k_x, k_w0, k_w1, k_wo, key = jax.random.split(key, 5)
    hs2 = jax.random.normal(k_x, (B2, S2, D2), dtype=jnp.float32)
    wi0_2 = jax.random.normal(k_w0, (D2, F2), dtype=jnp.float32) * 0.02
    wi1_2 = jax.random.normal(k_w1, (D2, F2), dtype=jnp.float32) * 0.02
    wo_2 = jax.random.normal(k_wo, (F2, D2), dtype=jnp.float32) * 0.02

    out2 = jax.block_until_ready(
        udop_dense_gated_act_dense(hs2, wi0_2, wi1_2, wo_2, tm=128, tf=256))
    ref2 = _reference(hs2, wi0_2, wi1_2, wo_2)
    assert out2.shape == (B2, S2, D2)
    assert jnp.allclose(out2, ref2, atol=1e-3, rtol=1e-3)

    # Test 3: bf16 operands (16-row sublane alignment, cast-to-wo-dtype branch).
    hs3 = hidden_states.astype(jnp.bfloat16)
    out3 = jax.block_until_ready(
        udop_dense_gated_act_dense(
            hs3, wi0.astype(jnp.bfloat16), wi1.astype(jnp.bfloat16),
            wo.astype(jnp.bfloat16)))
    assert out3.shape == (B, S, D)
    assert jnp.allclose(out3.astype(jnp.float32), ref, atol=5e-2, rtol=5e-2)

    print("KERNEL_OK")
</pallas_src>

<mosaic_0001>
module attributes {stable_mosaic.version = 11 : i64} {
  func.func @_ffn_kernel(%arg0: i32, %arg1: i32, %arg2: memref<16x32xf32, #tpu.memory_space<vmem>>, %arg3: memref<32x128xf32, #tpu.memory_space<vmem>>, %arg4: memref<32x128xf32, #tpu.memory_space<vmem>>, %arg5: memref<128x32xf32, #tpu.memory_space<vmem>>, %arg6: memref<16x32xf32, #tpu.memory_space<vmem>>, %arg7: memref<16x32xf32, #tpu.memory_space<vmem>>) attributes {dimension_semantics = [#tpu.dimension_semantics<parallel>, #tpu.dimension_semantics<arbitrary>], iteration_bounds = array<i64: 1, 1>, scalar_prefetch = 0 : i64, scratch_operands = 1 : i64, tpu.core_type = #tpu.core_type<tc>, window_params = [{transform_indices = @transform_0, window_bounds = array<i64: 16, 32>}, {transform_indices = @transform_1, window_bounds = array<i64: 32, 128>}, {transform_indices = @transform_2, window_bounds = array<i64: 32, 128>}, {transform_indices = @transform_3, window_bounds = array<i64: 128, 32>}, {transform_indices = @transform_4, window_bounds = array<i64: 16, 32>}]} {
    %c0_i32 = arith.constant 0 : i32
    %0 = arith.cmpi eq, %arg1, %c0_i32 : i32
    %1 = arith.extui %0 : i1 to i32
    %c0_i32_0 = arith.constant 0 : i32
    %2 = arith.cmpi ne, %1, %c0_i32_0 : i32
    scf.if %2 {
      %cst_20 = arith.constant 0.000000e+00 : f32
      %30 = vector.broadcast %cst_20 : f32 to vector<16x32xf32>
      %c0_21 = arith.constant 0 : index
      %c0_22 = arith.constant 0 : index
      %31 = vector.load %arg7[%c0_21, %c0_22] : memref<16x32xf32, #tpu.memory_space<vmem>>, vector<16x32xf32>
      tpu.vector_store %arg7[%c0_21, %c0_22], %30 {strides = array<i32>} : memref<16x32xf32, #tpu.memory_space<vmem>>, vector<16x32xf32>,
    } else {
    }
    %c0 = arith.constant 0 : index
    %c0_1 = arith.constant 0 : index
    %3 = vector.load %arg2[%c0, %c0_1] : memref<16x32xf32, #tpu.memory_space<vmem>>, vector<16x32xf32>
    %c0_2 = arith.constant 0 : index
    %c0_3 = arith.constant 0 : index
    %4 = vector.load %arg3[%c0_2, %c0_3] : memref<32x128xf32, #tpu.memory_space<vmem>>, vector<32x128xf32>
    %cst = arith.constant dense<0.000000e+00> : vector<16x128xf32>
    %5 = tpu.matmul %3, %4, %cst {dimension_numbers = #tpu.dot_dimension_numbers<[1], [0], [0], [1], [0, 0, 1, 1], [], []>} : vector<16x32xf32>, vector<32x128xf32>, vector<16x128xf32> -> vector<16x128xf32>
    %c0_4 = arith.constant 0 : index
    %c0_5 = arith.constant 0 : index
    %6 = vector.load %arg4[%c0_4, %c0_5] : memref<32x128xf32, #tpu.memory_space<vmem>>, vector<32x128xf32>
    %cst_6 = arith.constant dense<0.000000e+00> : vector<16x128xf32>
    %7 = tpu.matmul %3, %6, %cst_6 {dimension_numbers = #tpu.dot_dimension_numbers<[1], [0], [0], [1], [0, 0, 1, 1], [], []>} : vector<16x32xf32>, vector<32x128xf32>, vector<16x128xf32> -> vector<16x128xf32>
    %cst_7 = arith.constant 5.000000e-01 : f32
    %8 = vector.broadcast %cst_7 : f32 to vector<16x128xf32>
    %9 = arith.mulf %8, %5 : vector<16x128xf32>
    %cst_8 = arith.constant 4.471500e-02 : f32
    %10 = vector.broadcast %cst_8 : f32 to vector<16x128xf32>
    %11 = arith.mulf %10, %5 : vector<16x128xf32>
    %12 = arith.mulf %11, %5 : vector<16x128xf32>
    %13 = arith.mulf %12, %5 : vector<16x128xf32>
    %14 = arith.addf %5, %13 : vector<16x128xf32>
    %cst_9 = arith.constant 0.797884583 : f32
    %15 = vector.broadcast %cst_9 : f32 to vector<16x128xf32>
    %16 = arith.mulf %15, %14 : vector<16x128xf32>
    %17 = math.tanh %16 : vector<16x128xf32>
    %cst_10 = arith.constant 1.000000e+00 : f32
    %18 = vector.broadcast %cst_10 : f32 to vector<16x128xf32>
    %19 = arith.addf %18, %17 : vector<16x128xf32>
    %20 = arith.mulf %9, %19 : vector<16x128xf32>
    %21 = arith.mulf %20, %7 : vector<16x128xf32>
    %c0_11 = arith.constant 0 : index
    %c0_12 = arith.constant 0 : index
    %22 = vector.load %arg7[%c0_11, %c0_12] : memref<16x32xf32, #tpu.memory_space<vmem>>, vector<16x32xf32>
    %c0_13 = arith.constant 0 : index
    %c0_14 = arith.constant 0 : index
    %23 = vector.load %arg5[%c0_13, %c0_14] : memref<128x32xf32, #tpu.memory_space<vmem>>, vector<128x32xf32>
    %cst_15 = arith.constant dense<0.000000e+00> : vector<16x32xf32>
    %24 = tpu.matmul %21, %23, %cst_15 {dimension_numbers = #tpu.dot_dimension_numbers<[1], [0], [0], [1], [0, 0, 1, 1], [], []>} : vector<16x128xf32>, vector<128x32xf32>, vector<16x32xf32> -> vector<16x32xf32>
    %25 = arith.addf %22, %24 : vector<16x32xf32>
    %c0_16 = arith.constant 0 : index
    %c0_17 = arith.constant 0 : index
    %26 = vector.load %arg7[%c0_16, %c0_17] : memref<16x32xf32, #tpu.memory_space<vmem>>, vector<16x32xf32>
    tpu.vector_store %arg7[%c0_16, %c0_17], %25 {strides = array<i32>} : memref<16x32xf32, #tpu.memory_space<vmem>>, vector<16x32xf32>,
    %c0_i32_18 = arith.constant 0 : i32
    %27 = arith.cmpi eq, %arg1, %c0_i32_18 : i32
    %28 = arith.extui %27 : i1 to i32
    %c0_i32_19 = arith.constant 0 : i32
    %29 = arith.cmpi ne, %28, %c0_i32_19 : i32
    scf.if %29 {
      %c0_20 = arith.constant 0 : index
      %c0_21 = arith.constant 0 : index
      %30 = vector.load %arg7[%c0_20, %c0_21] : memref<16x32xf32, #tpu.memory_space<vmem>>, vector<16x32xf32>
      %c0_22 = arith.constant 0 : index
      %c0_23 = arith.constant 0 : index
      %31 = vector.load %arg6[%c0_22, %c0_23] : memref<16x32xf32, #tpu.memory_space<vmem>>, vector<16x32xf32>
      tpu.vector_store %arg6[%c0_22, %c0_23], %30 {strides = array<i32>} : memref<16x32xf32, #tpu.memory_space<vmem>>, vector<16x32xf32>,
    } else {
    }
    return
  }
  func.func @transform_0(%arg0: i32, %arg1: i32) -> (i32, i32) {
    %c0_i32 = arith.constant 0 : i32
    %c0_i32_0 = arith.constant 0 : i32
    return %arg0, %c0_i32 : i32, i32
  }
  func.func @transform_1(%arg0: i32, %arg1: i32) -> (i32, i32) {
    %c0_i32 = arith.constant 0 : i32
    %c0_i32_0 = arith.constant 0 : i32
    return %c0_i32, %arg1 : i32, i32
  }
  func.func @transform_2(%arg0: i32, %arg1: i32) -> (i32, i32) {
    %c0_i32 = arith.constant 0 : i32
    %c0_i32_0 = arith.constant 0 : i32
    return %c0_i32, %arg1 : i32, i32
  }
  func.func @transform_3(%arg0: i32, %arg1: i32) -> (i32, i32) {
    %c0_i32 = arith.constant 0 : i32
    %c0_i32_0 = arith.constant 0 : i32
    return %arg1, %c0_i32 : i32, i32
  }
  func.func @transform_4(%arg0: i32, %arg1: i32) -> (i32, i32) {
    %c0_i32 = arith.constant 0 : i32
    %c0_i32_0 = arith.constant 0 : i32
    return %arg0, %c0_i32 : i32, i32
  }
}

</mosaic_0001>

<llo_original>
// kernel: tpu_custom_call.1
$region0: #{tpu_custom_call.1}
  #allocation0 [shape = 'u32[]', space=smem, size = 0x4, offset = 0x4, fixed_abs, tag = 'smem constant byte address 0x4 - core index']
  #allocation1 [shape = 'u32[72,128]{1,0:T(1,128)}', space=vmem, size = 0x9000, scoped, tag = 'internal scratch']
  #allocation2 [shape = 'f32[16,32]{1,0:T(8,128)}', space=vmem, size = 0x2000, scoped, tag = 'scratch operand']
  %s0 = inlined_call_operand.vmem [shape: f32[16,32], index: 0, kind: input, shape index: {}]
  %s1 = inlined_call_operand.vmem [shape: f32[32,128], index: 1, kind: input, shape index: {}]
  %s2 = inlined_call_operand.vmem [shape: f32[32,128], index: 2, kind: input, shape index: {}]
  %s3 = inlined_call_operand.vmem [shape: f32[128,32], index: 3, kind: input, shape index: {}]
  %s4 = inlined_call_operand.hbm [shape: f32[16,32], index: 4, kind: output, shape index: {}]
  %s5 = sld [smem:[#allocation0]]
  $region34: #{tpu_custom_call.1} parent=0
    _
  %s7 = ssub.s32 1, %s5
  %s8 = scalar_select 0, %s7, %s5
  $region1: #{tpu_custom_call.1} parent=0
    #allocation3 [shape = 'u8[8192]{0}', space=vmem, size = 0x2000, scoped, tag = 'output window, operand 0, single buffered']
    #allocation4 [shape = 's32[1]{0}', space=sflag, size = 0x4, scoped, tag = 'scoped memory for tpu_custom_call.1']
    %9 = vsyncpa [#allocation4], 0
    // Predicated region
    $region2: #{tpu_custom_call.1} parent=1 // pred_check
      _
    $region3: #{tpu_custom_call.1} parent=1 // pred_check_branch
      %11 = sbr.rel (0) target = $region5
    $region4: #{tpu_custom_call.1} parent=1 // pred_region
      _
    $region5: #{tpu_custom_call.1} parent=1 // pred_fallthru
      _
    // Predicated region
    $region6: #{tpu_custom_call.1} parent=1 // pred_check
      _
    $region7: #{tpu_custom_call.1} parent=1 // pred_check_branch
      %13 = sbr.rel (0) target = $region9
    $region8: #{tpu_custom_call.1} parent=1 // pred_region
      _
    $region9: #{tpu_custom_call.1} parent=1 // pred_fallthru
      _
    // Predicated region
    $region10: #{tpu_custom_call.1} parent=1 // pred_check
      _
    $region11: #{tpu_custom_call.1} parent=1 // pred_check_branch
      %15 = sbr.rel (0) target = $region13
    $region12: #{tpu_custom_call.1} parent=1 // pred_region
      _
    $region13: #{tpu_custom_call.1} parent=1 // pred_fallthru
      _
    // Predicated region
    $region14: #{tpu_custom_call.1} parent=1 // pred_check
      _
    $region15: #{tpu_custom_call.1} parent=1 // pred_check_branch
      %17 = sbr.rel (0) target = $region17
    $region16: #{tpu_custom_call.1} parent=1 // pred_region
      _
    $region17: #{tpu_custom_call.1} parent=1 // pred_fallthru
      _
    %p18 = scmp.eq.s32.totalorder 0, 0
    // Predicated region
    $region18: #{tpu_custom_call.1} parent=1 // pred_check
      %p19 = pneg %p18
    $region19: #{tpu_custom_call.1} parent=1 // pred_check_branch
      %21 = sbr.rel (%p19) target = $region21
    $region20: #{tpu_custom_call.1} parent=1 // pred_region
      %vm22 = vcmask 261120
      %23 = vst.msk [vmem:[#allocation2] sm:$0xff] %vm22, 0.0
      %24 = vst.msk [vmem:[#allocation2 + $0x8] sm:$0xff] %vm22, 0.0
    $region21: #{tpu_custom_call.1} parent=1 // pred_fallthru
      _
    %v25 = vld [vmem:[%s0] sm:$0xff]
    %v26 = vld [vmem:[%s0 + $0x8] sm:$0xff]
    %v27 = vld [vmem:[%s1] sm:$0xff]
    %v28 = vld [vmem:[%s1 + $0x8] sm:$0xff]
    %v29 = vld [vmem:[%s1 + $0x10] sm:$0xff]
    %v30 = vld [vmem:[%s1 + $0x18] sm:$0xff]
    %vm31 = vcmask 261120
    %v33 = vsel %vm31, %v25, 0
    %v36 = vsel %vm31, %v26, 0
    %38 = vmatpush.msra.mxu0 0.0
    %39 = vmatpush.msra.mxu0 0.0
    %40 = vmatpush.msra.mxu0 0.0
    %41 = vmatpush.msra.mxu0 0.0
    %42 = vmatpush.msra.mxu0 0.0
    %43 = vmatpush.msra.mxu0 0.0
    %44 = vmatpush.msra.mxu0 0.0
    %45 = vmatpush.msra.mxu0 0.0
    %46 = vmatpush.msra.mxu0 0.0
    %47 = vmatpush.msra.mxu0 0.0
    %48 = vmatpush.msra.mxu0 0.0
    %49 = vmatpush.msra.mxu0 0.0
    %50 = vmatpush.msra.mxu0 %v30
    %51 = vmatpush.msra.mxu0 %v29
    %52 = vmatpush.msra.mxu0 %v28
    %53 = vmatpush.msra.mxu0 %v27
    %54 = vmatmul.f32.gmra.mxu0 %v33
    %v55 = vpop.f32.mrf.mxu0
    %v56 = vadd.f32 0.0, %v55
    %57 = vmatmul.f32.gmra.mxu0 %v36
    %v58 = vpop.f32.mrf.mxu0
    %v59 = vadd.f32 0.0, %v58
    %60 = vdwg.mxu0
    %v61 = vld [vmem:[%s2] sm:$0xff]
    %v62 = vld [vmem:[%s2 + $0x8] sm:$0xff]
    %v63 = vld [vmem:[%s2 + $0x10] sm:$0xff]
    %v64 = vld [vmem:[%s2 + $0x18] sm:$0xff]
    %65 = vmatpush.msra.mxu0 0.0
    %66 = vmatpush.msra.mxu0 0.0
    %67 = vmatpush.msra.mxu0 0.0
    %68 = vmatpush.msra.mxu0 0.0
    %69 = vmatpush.msra.mxu0 0.0
    %70 = vmatpush.msra.mxu0 0.0
    %71 = vmatpush.msra.mxu0 0.0
    %72 = vmatpush.msra.mxu0 0.0
    %73 = vmatpush.msra.mxu0 0.0
    %74 = vmatpush.msra.mxu0 0.0
    %75 = vmatpush.msra.mxu0 0.0
    %76 = vmatpush.msra.mxu0 0.0
    %77 = vmatpush.msra.mxu0 %v64
    %78 = vmatpush.msra.mxu0 %v63
    %79 = vmatpush.msra.mxu0 %v62
    %80 = vmatpush.msra.mxu0 %v61
    %81 = vmatmul.f32.gmra.mxu0 %v33
    %v82 = vpop.f32.mrf.mxu0
    %v83 = vadd.f32 0.0, %v82
    %84 = vmatmul.f32.gmra.mxu0 %v36
    %v85 = vpop.f32.mrf.mxu0
    %v86 = vadd.f32 0.0, %v85
    %87 = vdwg.mxu0
    %v88 = vmul.f32 %v56, 0.5
    %v89 = vmul.f32 %v59, 0.5
    %v90 = vmul.f32 %v56, 0.044715
    %v91 = vmul.f32 %v59, 0.044715
    %v92 = vmul.f32 %v90, %v56
    %v93 = vmul.f32 %v91, %v59
    %v94 = vmul.f32 %v92, %v56
    %v95 = vmul.f32 %v93, %v59
    %v96 = vadd.f32 %v56, %v94
    %v97 = vadd.f32 %v59, %v95
    %v98 = vmul.f32 %v96, 0.7978846
    %v99 = vmul.f32 %v97, 0.7978846
    %v100 = vtanh.pop %v98
    %v101 = vtanh.pop %v99
    %v102 = vadd.f32 %v100, 1.0
    %v103 = vadd.f32 %v101, 1.0
    %v104 = vmul.f32 %v88, %v102
    %v105 = vmul.f32 %v89, %v103
    %v106 = vmul.f32 %v104, %v83
    %v107 = vmul.f32 %v105, %v86
    %v108 = vld [vmem:[#allocation2] sm:$0xff]
    %v109 = vld [vmem:[#allocation2 + $0x8] sm:$0xff]
    %v110 = vld [vmem:[%s3] sm:$0xff]
    %v111 = vld [vmem:[%s3 + $0x8] sm:$0xff]
    %v112 = vld [vmem:[%s3 + $0x10] sm:$0xff]
    %v113 = vld [vmem:[%s3 + $0x18] sm:$0xff]
    %v114 = vld [vmem:[%s3 + $0x20] sm:$0xff]
    %v115 = vld [vmem:[%s3 + $0x28] sm:$0xff]
    %v116 = vld [vmem:[%s3 + $0x30] sm:$0xff]
    %v117 = vld [vmem:[%s3 + $0x38] sm:$0xff]
    %v118 = vld [vmem:[%s3 + $0x40] sm:$0xff]
    %v119 = vld [vmem:[%s3 + $0x48] sm:$0xff]
    %v120 = vld [vmem:[%s3 + $0x50] sm:$0xff]
    %v121 = vld [vmem:[%s3 + $0x58] sm:$0xff]
    %v122 = vld [vmem:[%s3 + $0x60] sm:$0xff]
    %v123 = vld [vmem:[%s3 + $0x68] sm:$0xff]
    %v124 = vld [vmem:[%s3 + $0x70] sm:$0xff]
    %v125 = vld [vmem:[%s3 + $0x78] sm:$0xff]
    %126 = vmatpush.msra.mxu0 %v125
    %127 = vmatpush.msra.mxu0 %v124
    %128 = vmatpush.msra.mxu0 %v123
    %129 = vmatpush.msra.mxu0 %v122
    %130 = vmatpush.msra.mxu0 %v121
    %131 = vmatpush.msra.mxu0 %v120
    %132 = vmatpush.msra.mxu0 %v119
    %133 = vmatpush.msra.mxu0 %v118
    %134 = vmatpush.msra.mxu0 %v117
    %135 = vmatpush.msra.mxu0 %v116
    %136 = vmatpush.msra.mxu0 %v115
    %137 = vmatpush.msra.mxu0 %v114
    %138 = vmatpush.msra.mxu0 %v113
    %139 = vmatpush.msra.mxu0 %v112
    %140 = vmatpush.msra.mxu0 %v111
    %141 = vmatpush.msra.mxu0 %v110
    %142 = vmatmul.f32.gmra.mxu0 %v106
    %v143 = vpop.f32.mrf.mxu0
    %v144 = vadd.f32 0.0, %v143
    %145 = vmatmul.f32.gmra.mxu0 %v107
    %v146 = vpop.f32.mrf.mxu0
    %v147 = vadd.f32 0.0, %v146
    %148 = vdwg.mxu0
    %v149 = vadd.f32 %v108, %v144
    %v150 = vadd.f32 %v109, %v147
    %151 = vst.msk [vmem:[#allocation2] sm:$0xff] %vm31, %v149
    %152 = vst.msk [vmem:[#allocation2 + $0x8] sm:$0xff] %vm31, %v150
    // Predicated region
    $region22: #{tpu_custom_call.1} parent=1 // pred_check
      %p153 = pneg %p18
    $region23: #{tpu_custom_call.1} parent=1 // pred_check_branch
      %155 = sbr.rel (%p153) target = $region25
    $region24: #{tpu_custom_call.1} parent=1 // pred_region
      %v156 = vld [vmem:[#allocation2] sm:$0xff]
      %v157 = vld [vmem:[#allocation2 + $0x8] sm:$0xff]
      %158 = vst.msk [vmem:[#allocation3] sm:$0xff] %vm31, %v156
      %159 = vst.msk [vmem:[#allocation3 + $0x8] sm:$0xff] %vm31, %v157
    $region25: #{tpu_custom_call.1} parent=1 // pred_fallthru
      _
    // Predicated region
    $region26: #{tpu_custom_call.1} parent=1 // pred_check
      _
    $region27: #{tpu_custom_call.1} parent=1 // pred_check_branch
      %161 = sbr.rel (0) target = $region29
    $region28: #{tpu_custom_call.1} parent=1 // pred_region
      %163 = vsyncadd [#allocation4], 0
      %s164 = sshll.u32 [#allocation3], 4
      %s165 = int_to_ptr.vmem [resolvable:$true] %s164
      %s166 = sshll.u32 %s4, 4
      %s167 = int_to_ptr.hbm [resolvable:$true] %s166
      %172 = dma.vmem_to_hbm [thread:$0]  %s165, 256, %s167, [#allocation4], 128, 128, 8
    $region29: #{tpu_custom_call.1} parent=1 // pred_fallthru
      _
    // Predicated region
    $region30: #{tpu_custom_call.1} parent=1 // pred_check
      _
    $region31: #{tpu_custom_call.1} parent=1 // pred_check_branch
      %174 = sbr.rel (0) target = $region33
    $region32: #{tpu_custom_call.1} parent=1 // pred_region
      %176 = dma.done [#allocation4], 256
    $region33: #{tpu_custom_call.1} parent=1 // pred_fallthru
      _
    %177 = vsyncpa [#allocation4], 1

</llo_original>
